<compile_context>
chip_gen: v7x
topology: tpu7x:2x2x1
jax: 0.10.0
libtpu: 0.0.40
codegen_flags: <defaults>
</compile_context>

<pallas_src>
import jax
import jax.numpy as jnp
from jax import lax
from jax.experimental import pallas as pl
from jax.experimental.pallas import tpu as pltpu


def _similarity_kernel(enc_ref, dec_ref, out_ref):
    # enc_ref: [TM, H] VMEM tile, dec_ref: [1, H] (resident), out_ref: [1, TM].
    # Contract H of both operands -> lane-dense [1, TM] result on the MXU,
    # f32 accumulation, cast back to output dtype.
    out_ref[...] = lax.dot_general(
        dec_ref[...],
        enc_ref[...],
        dimension_numbers=(((1,), (1,)), ((), ())),
        preferred_element_type=jnp.float32,
    ).astype(out_ref.dtype)


def _round_block_m(tm: int, m: int) -> int:
    """Round an M-tile to satisfy the lane-dense [1, tm] output block.

    tm must be a multiple of 128 (lane width) unless it covers the full
    extent M. 128 is also a multiple of the 8/16/32 sublane packing needed by
    f32/bf16/int8 encoder blocks, so one rule covers all dtypes.
    """
    if tm >= m:
        return m
    tm = max(128, tm - tm % 128)
    return min(tm, m)


def _choose_block_m(m: int, h: int, itemsize: int,
                    target_bytes: int = 8 * 1024 * 1024) -> int:
    """Pick an M-tile so one encoder block is ~target_bytes."""
    tm = max(128, target_bytes // max(1, h * itemsize))
    return _round_block_m(int(tm), m)


def similarity1(encoder_states: jax.Array, decoder_state: jax.Array,
                *, block_m: int | None = None,
                force_pallas: bool = False) -> jax.Array:
    """Equivalent of torch.matmul(encoder_states, decoder_state).

    encoder_states: [B, S, H], decoder_state: [H]  ->  [B, S]
    """
    B, S, H = encoder_states.shape
    assert decoder_state.shape == (H,)

    # Small-H guard: with H < 128 the lane axis is mostly padding, so the
    # custom kernel wastes VMEM/load bandwidth vs. a packed XLA layout.
    if H < 128 and not force_pallas:
        return jnp.einsum("bsh,h->bs", encoder_states, decoder_state)

    M = B * S
    itemsize = jnp.dtype(encoder_states.dtype).itemsize
    if block_m is not None:
        tm = _round_block_m(int(block_m), M)   # validate user-supplied tile
    else:
        tm = _choose_block_m(M, H, itemsize)

    enc2d = encoder_states.reshape(M, H)   # glue: reshape only
    dec2d = decoder_state.reshape(1, H)    # lane-dense decoder vector

    grid = (pl.cdiv(M, tm),)

    cost = pl.CostEstimate(
        flops=2 * M * H,
        transcendentals=0,
        bytes_accessed=M * H * itemsize + H * itemsize + M * itemsize,
    )

    out2d = pl.pallas_call(
        _similarity_kernel,
        out_shape=jax.ShapeDtypeStruct((1, M), encoder_states.dtype),
        grid=grid,
        in_specs=[
            # Stream encoder rows; full H kept as last dim (no K tiling).
            # (Default 2-deep buffering; pl.Buffered(3) only if xprof shows
            # exposed DMA gaps at step boundaries.)
            pl.BlockSpec((tm, H), lambda i: (i, 0)),
            # Decoder vector: constant block index -> stays resident in VMEM.
            pl.BlockSpec((1, H), lambda i: (0, 0)),
        ],
        # Lane-dense output: tm sits on the 128-lane axis -> unmasked stores.
        out_specs=pl.BlockSpec((1, tm), lambda i: (0, i)),
        compiler_params=pltpu.CompilerParams(
            # M tiles are fully independent -> shard across TCs on v7x.
            dimension_semantics=("parallel",),
            # 2 x ~8 MiB enc buffers + dec + out; above v5e's 16 MiB scoped
            # default, comfortably under v7x's 64 MiB physical VMEM.
            vmem_limit_bytes=40 * 1024 * 1024,
        ),
        cost_estimate=cost,
    )(enc2d, dec2d)

    return out2d.reshape(B, S)


if __name__ == "__main__":
    key = jax.random.PRNGKey(0)
    k_enc, k_dec, k_enc2, k_dec2 = jax.random.split(key, 4)

    # Primary small-shape check (module-implied shapes). force_pallas=True so
    # the kernel itself is exercised even below the H>=128 heuristic.
    B, S, H = 2, 8, 32
    encoder_states = jax.random.normal(k_enc, (B, S, H), dtype=jnp.float32)
    decoder_state = jax.random.normal(k_dec, (H,), dtype=jnp.float32)

    out = similarity1(encoder_states, decoder_state, force_pallas=True)
    jax.block_until_ready(out)

    ref = jnp.einsum("bsh,h->bs", encoder_states, decoder_state)
    assert out.shape == (B, S)
    assert jnp.allclose(out, ref, atol=1e-5, rtol=1e-5)

    # Default dispatch path for small H (einsum fallback) must agree too.
    out_fb = similarity1(encoder_states, decoder_state)
    jax.block_until_ready(out_fb)
    assert jnp.allclose(out_fb, ref, atol=1e-5, rtol=1e-5)

    # Secondary check: tiled/pipelined lane-dense path with a ragged tail
    # (M = 160, block_m = 128 -> 2 grid steps, last block partial).
    B2, S2, H2 = 4, 40, 128
    enc2 = jax.random.normal(k_enc2, (B2, S2, H2), dtype=jnp.float32)
    dec2 = jax.random.normal(k_dec2, (H2,), dtype=jnp.float32)

    out2 = similarity1(enc2, dec2, block_m=128)
    jax.block_until_ready(out2)

    ref2 = jnp.einsum("bsh,h->bs", enc2, dec2)
    assert out2.shape == (B2, S2)
    assert jnp.allclose(out2, ref2, atol=1e-4, rtol=1e-4)

    print("KERNEL_OK")
</pallas_src>

<mosaic_0001>
module attributes {stable_mosaic.version = 11 : i64} {
  func.func @_similarity_kernel(%arg0: i32, %arg1: memref<16x32xf32, #tpu.memory_space<vmem>>, %arg2: memref<1x32xf32, #tpu.memory_space<vmem>>, %arg3: memref<1x16xf32, #tpu.memory_space<vmem>>) attributes {dimension_semantics = [#tpu.dimension_semantics<parallel>], iteration_bounds = array<i64: 1>, scalar_prefetch = 0 : i64, scratch_operands = 0 : i64, tpu.core_type = #tpu.core_type<tc>, window_params = [{transform_indices = @transform_0, window_bounds = array<i64: 16, 32>}, {pipeline_mode = #tpu.pipeline_mode<synchronous>, transform_indices = @transform_1, window_bounds = array<i64: 1, 32>}, {transform_indices = @transform_2, window_bounds = array<i64: 1, 16>}]} {
    %c0 = arith.constant 0 : index
    %c0_0 = arith.constant 0 : index
    %0 = vector.load %arg2[%c0, %c0_0] : memref<1x32xf32, #tpu.memory_space<vmem>>, vector<1x32xf32>
    %c0_1 = arith.constant 0 : index
    %c0_2 = arith.constant 0 : index
    %1 = vector.load %arg1[%c0_1, %c0_2] : memref<16x32xf32, #tpu.memory_space<vmem>>, vector<16x32xf32>
    %cst = arith.constant dense<0.000000e+00> : vector<1x16xf32>
    %2 = tpu.matmul %0, %1, %cst {dimension_numbers = #tpu.dot_dimension_numbers<[1], [1], [0], [0], [0, 0, 1, 0], [], []>} : vector<1x32xf32>, vector<16x32xf32>, vector<1x16xf32> -> vector<1x16xf32>
    %c0_3 = arith.constant 0 : index
    %c0_4 = arith.constant 0 : index
    %3 = vector.load %arg3[%c0_3, %c0_4] : memref<1x16xf32, #tpu.memory_space<vmem>>, vector<1x16xf32>
    tpu.vector_store %arg3[%c0_3, %c0_4], %2 {strides = array<i32>} : memref<1x16xf32, #tpu.memory_space<vmem>>, vector<1x16xf32>,
    return
  }
  func.func @transform_0(%arg0: i32) -> (i32, i32) {
    %c0_i32 = arith.constant 0 : i32
    %c0_i32_0 = arith.constant 0 : i32
    return %arg0, %c0_i32 : i32, i32
  }
  func.func @transform_1(%arg0: i32) -> (i32, i32) {
    %c0_i32 = arith.constant 0 : i32
    %c0_i32_0 = arith.constant 0 : i32
    %c0_i32_1 = arith.constant 0 : i32
    return %c0_i32, %c0_i32_0 : i32, i32
  }
  func.func @transform_2(%arg0: i32) -> (i32, i32) {
    %c0_i32 = arith.constant 0 : i32
    %c0_i32_0 = arith.constant 0 : i32
    return %c0_i32, %arg0 : i32, i32
  }
}

</mosaic_0001>

<llo_original>
// kernel: tpu_custom_call.1
$region0: #{tpu_custom_call.1}
  #allocation0 [shape = 'u32[]', space=smem, size = 0x4, offset = 0x4, fixed_abs, tag = 'smem constant byte address 0x4 - core index']
  #allocation1 [shape = 'u32[144,128]{1,0:T(1,128)}', space=vmem, size = 0x12000, scoped, tag = 'internal scratch']
  %s0 = inlined_call_operand.hbm [shape: f32[16,32], index: 0, kind: input, shape index: {}]
  %s1 = inlined_call_operand.vmem [shape: f32[1,32], index: 1, kind: input, shape index: {}]
  %s2 = inlined_call_operand.hbm [shape: f32[1,16], index: 2, kind: output, shape index: {}]
  %s3 = sld [smem:[#allocation0]]
  $region22: #{tpu_custom_call.1} parent=0
    _
  %s5 = ssub.s32 1, %s3
  %s6 = scalar_select 0, %s5, %s3
  $region1: #{tpu_custom_call.1} parent=0
    #allocation2 [shape = 'u8[8192]{0}', space=vmem, size = 0x2000, scoped, tag = 'input window, operand 0, single buffered']
    #allocation3 [shape = 's32[1]{0}', space=sflag, size = 0x4, scoped, tag = 'scoped memory for tpu_custom_call.1']
    #allocation4 [shape = 's32[1]{0}', space=sflag, size = 0x4, scoped, tag = 'scoped memory for tpu_custom_call.1']
    #allocation5 [shape = 'u8[512]{0}', space=vmem, size = 0x400, scoped, tag = 'output window, operand 0, single buffered']
    %7 = vsyncpa [#allocation3], 0
    %8 = vsyncpa [#allocation4], 0
    // Predicated region
    $region2: #{tpu_custom_call.1} parent=1 // pred_check
      _
    $region3: #{tpu_custom_call.1} parent=1 // pred_check_branch
      %10 = sbr.rel (0) target = $region5
    $region4: #{tpu_custom_call.1} parent=1 // pred_region
      %s12 = ssub.s32 256, 256
      %13 = vsyncadd [#allocation3], %s12
      %s14 = sshll.u32 [#allocation2], 4
      %s15 = int_to_ptr.vmem [resolvable:$true] %s14
      %20 = dma.hbm_to_vmem [thread:$0]  %s0, 256, %s15, [#allocation3], 128, 128, 8
    $region5: #{tpu_custom_call.1} parent=1 // pred_fallthru
      _
    // Predicated region
    $region6: #{tpu_custom_call.1} parent=1 // pred_check
      _
    $region7: #{tpu_custom_call.1} parent=1 // pred_check_branch
      %22 = sbr.rel (0) target = $region9
    $region8: #{tpu_custom_call.1} parent=1 // pred_region
      _
    $region9: #{tpu_custom_call.1} parent=1 // pred_fallthru
      _
    // Predicated region
    $region10: #{tpu_custom_call.1} parent=1 // pred_check
      _
    $region11: #{tpu_custom_call.1} parent=1 // pred_check_branch
      %24 = sbr.rel (0) target = $region13
    $region12: #{tpu_custom_call.1} parent=1 // pred_region
      %25 = dma.done [#allocation3], 256
    $region13: #{tpu_custom_call.1} parent=1 // pred_fallthru
      _
    %v26 = vld [vmem:[%s1] sm:$0x1]
    %v27 = vld [vmem:[#allocation2] sm:$0xff]
    %v28 = vld [vmem:[#allocation2 + $0x8] sm:$0xff]
    %vm29 = vcmask 261120
    %v31 = vsel %vm29, %v26, 0
    %v34 = vsel %vm29, %v27, 0
    %v37 = vsel %vm29, %v28, 0
    %39 = vmatprep.subr.mxu0 0.0
    %40 = vmatpush1.xpose.msra.mxu0 %v34
    %41 = vmatprep.subr.mxu0 0.0
    %42 = vmatpush1.xpose.msra.mxu0 %v37
    %43 = vmatprep.subr.mxu0 0.0
    %44 = vmatpush1.xpose.msra.mxu0 0.0
    %45 = vmatprep.subr.mxu0 0.0
    %46 = vmatpush1.xpose.msra.mxu0 0.0
    %47 = vmatprep.subr.mxu0 0.0
    %48 = vmatpush1.xpose.msra.mxu0 0.0
    %49 = vmatprep.subr.mxu0 0.0
    %50 = vmatpush1.xpose.msra.mxu0 0.0
    %51 = vmatprep.subr.mxu0 0.0
    %52 = vmatpush1.xpose.msra.mxu0 0.0
    %53 = vmatprep.subr.mxu0 0.0
    %54 = vmatpush1.xpose.msra.mxu0 0.0
    %55 = vmatprep.subr.mxu0 0.0
    %56 = vmatpush1.xpose.msra.mxu0 0.0
    %57 = vmatprep.subr.mxu0 0.0
    %58 = vmatpush1.xpose.msra.mxu0 0.0
    %59 = vmatprep.subr.mxu0 0.0
    %60 = vmatpush1.xpose.msra.mxu0 0.0
    %61 = vmatprep.subr.mxu0 0.0
    %62 = vmatpush1.xpose.msra.mxu0 0.0
    %63 = vmatprep.subr.mxu0 0.0
    %64 = vmatpush1.xpose.msra.mxu0 0.0
    %65 = vmatprep.subr.mxu0 0.0
    %66 = vmatpush1.xpose.msra.mxu0 0.0
    %67 = vmatprep.subr.mxu0 0.0
    %68 = vmatpush1.xpose.msra.mxu0 0.0
    %69 = vmatprep.subr.mxu0 0.0
    %70 = vmatpush1.xpose.msra.mxu0 0.0
    %71 = vmatprep.subr.mxu0 0.0
    %72 = vmatpush1.xpose.msra.mxu0 0.0
    %73 = vmatprep.subr.mxu0 0.0
    %74 = vmatpush1.xpose.msra.mxu0 0.0
    %75 = vmatprep.subr.mxu0 0.0
    %76 = vmatpush1.xpose.msra.mxu0 0.0
    %77 = vmatprep.subr.mxu0 0.0
    %78 = vmatpush1.xpose.msra.mxu0 0.0
    %79 = vmatprep.subr.mxu0 0.0
    %80 = vmatpush1.xpose.msra.mxu0 0.0
    %81 = vmatprep.subr.mxu0 0.0
    %82 = vmatpush1.xpose.msra.mxu0 0.0
    %83 = vmatprep.subr.mxu0 0.0
    %84 = vmatpush1.xpose.msra.mxu0 0.0
    %85 = vmatprep.subr.mxu0 0.0
    %86 = vmatpush1.xpose.msra.mxu0 0.0
    %87 = vmatprep.subr.mxu0 0.0
    %88 = vmatpush1.xpose.msra.mxu0 0.0
    %89 = vmatprep.subr.mxu0 0.0
    %90 = vmatpush1.xpose.msra.mxu0 0.0
    %91 = vmatprep.subr.mxu0 0.0
    %92 = vmatpush1.xpose.msra.mxu0 0.0
    %93 = vmatprep.subr.mxu0 0.0
    %94 = vmatpush1.xpose.msra.mxu0 0.0
    %95 = vmatprep.subr.mxu0 0.0
    %96 = vmatpush1.xpose.msra.mxu0 0.0
    %97 = vmatprep.subr.mxu0 0.0
    %98 = vmatpush1.xpose.msra.mxu0 0.0
    %99 = vmatprep.subr.mxu0 0.0
    %100 = vmatpush1.xpose.msra.mxu0 0.0
    %101 = vmatprep.subr.mxu0 0.0
    %102 = vmatpush1.xpose.msra.mxu0 0.0
    %103 = vmatprep.mubr.f32.mxu0 0.0
    %104 = vmatmul.mubr.f32.gmra.mrb[0].mxu0 %v31
    %v105 = vpop.f32.mrb[0].mxu0
    %v106 = vadd.f32 0.0, %v105
    %v107 = vpop.f32.mrb[0].mxu0
    %108 = vdwg.mxu0
    %vm109 = vcmask 122880
    %110 = vst.msk [vmem:[#allocation5] sm:$0x1] %vm109, %v106
    // Predicated region
    $region14: #{tpu_custom_call.1} parent=1 // pred_check
      _
    $region15: #{tpu_custom_call.1} parent=1 // pred_check_branch
      %112 = sbr.rel (0) target = $region17
    $region16: #{tpu_custom_call.1} parent=1 // pred_region
      %s114 = ssub.s32 16, 16
      %115 = vsyncadd [#allocation4], %s114
      %s117 = sshll.u32 [#allocation5], 4
      %s118 = int_to_ptr.vmem [resolvable:$true] %s117
      %120 = dma.vmem_to_hbm [thread:$0]  %s118, 16, %s2, [#allocation4]
    $region17: #{tpu_custom_call.1} parent=1 // pred_fallthru
      _
    // Predicated region
    $region18: #{tpu_custom_call.1} parent=1 // pred_check
      _
    $region19: #{tpu_custom_call.1} parent=1 // pred_check_branch
      %122 = sbr.rel (0) target = $region21
    $region20: #{tpu_custom_call.1} parent=1 // pred_region
      %123 = dma.done [#allocation4], 16
    $region21: #{tpu_custom_call.1} parent=1 // pred_fallthru
      _
    %124 = vsyncpa [#allocation3], 1
    %125 = vsyncpa [#allocation4], 1

</llo_original>
